<compile_context>
chip_gen: v6e
topology: v6e:2x2x1
jax: 0.10.0
libtpu: 0.0.40
codegen_flags: <defaults>
</compile_context>

<pallas_src>
import functools

import numpy as np
import jax
import jax.numpy as jnp
from jax.experimental import pallas as pl
from jax.experimental.pallas import tpu as pltpu

_LANE = 128
_SUBSCALES = 8  # scale-tile granularity (keeps output sublane blocks aligned)


# ----------------------------------------------------------------------------
# Host-side setup (deterministic "parameters": the per-scale CWT matrices).
# ----------------------------------------------------------------------------

def _cdiv(a, b):
    return -(-a // b)


def _round_up(v, m):
    return _cdiv(v, m) * m


def _default_widths():
    # Same formula as the PyTorch module's __init__.
    return np.round((np.exp(np.linspace(0, 2.5, 26)) - 1) * 30, 0).astype(int) + 1


def _morlet_int_psi(precision=10):
    # pywt ContinuousWavelet('morl').wavefun(precision):
    #   x = linspace(-8, 8, 2**precision); psi(x) = exp(-x^2/2) * cos(5 x)
    # integrate_wavelet: int_psi = cumsum(psi) * step
    p = 2 ** precision
    xg = np.linspace(-8.0, 8.0, p)
    psi = np.exp(-xg ** 2 / 2.0) * np.cos(5.0 * xg)
    step = xg[1] - xg[0]
    int_psi = np.cumsum(psi) * step
    return int_psi, xg


def _scale_filter(int_psi, xg, scale):
    # Same subsampling as pywt.cwt (method='conv').
    step = xg[1] - xg[0]
    j = np.arange(scale * (xg[-1] - xg[0]) + 1) / (scale * step)
    j = j.astype(int)
    j = j[j < int_psi.size]
    return int_psi[j][::-1]  # length L


def _build_cwt_matrices(widths, t_len):
    """M[s] is (T, T) s.t. (M[s] @ x) == cropped(-sqrt(s)*diff(conv_full(x, filt_s)))."""
    int_psi, xg = _morlet_int_psi()
    mats = []
    for scale in np.asarray(widths).ravel():
        scale = float(scale)
        filt = _scale_filter(int_psi, xg, scale)
        L = filt.size
        # full conv length T+L-1; after diff: T+L-2; crop offset = floor((L-2)/2)
        d = (t_len + L - 2 - t_len) / 2.0
        m0 = int(np.floor(d)) if d > 0 else 0
        t_idx = np.arange(t_len)[:, None]
        k_idx = np.arange(t_len)[None, :]
        idx1 = m0 + t_idx + 1 - k_idx
        idx0 = m0 + t_idx - k_idx

        def take(fidx):
            valid = (fidx >= 0) & (fidx < L)
            return np.where(valid, filt[np.clip(fidx, 0, L - 1)], 0.0)

        mats.append(-np.sqrt(scale) * (take(idx1) - take(idx0)))
    return np.stack(mats, axis=0)  # (S, T, T), float64


@functools.lru_cache(maxsize=8)
def _cached_operands(widths_key, t_len, tk, s_pad, m_dtype_name):
    """Device-resident M operand + per-scale output scales (built once per config)."""
    mats = _build_cwt_matrices(np.asarray(widths_key, dtype=np.float64), t_len)
    num_scales = mats.shape[0]
    m_full = np.zeros((s_pad, t_len, tk), dtype=np.float64)
    scales = np.zeros((s_pad, 1), dtype=np.float32)   # padded rows -> 0 (discarded)
    if m_dtype_name == "int8":
        # per-scale symmetric quantization; dequant folded into the output std
        amax = np.max(np.abs(mats), axis=(1, 2))
        amax = np.where(amax > 0.0, amax, 1.0)
        m_full[:num_scales, :, :t_len] = np.clip(
            np.round(mats / amax[:, None, None] * 127.0), -127, 127)
        scales[:num_scales, 0] = (amax / 127.0).astype(np.float32)
        m_dev = jnp.asarray(m_full.reshape(s_pad * t_len, tk).astype(np.int8))
    else:
        m_full[:num_scales, :, :t_len] = mats
        scales[:num_scales, 0] = 1.0
        m_dev = jnp.asarray(m_full.reshape(s_pad * t_len, tk).astype(np.float32),
                            dtype=jnp.bfloat16)
    return m_dev, jnp.asarray(scales)


def _vmem_budget_bytes():
    # Generation-aware scoped-VMEM budget: ~75% of physical, capped at 100 MiB.
    # (=> ~48 MiB on a 64 MiB-VMEM chip, ~96 MiB on 128 MiB chips.)
    try:
        cap = int(pltpu.get_tpu_info().vmem_capacity_bytes)
    except Exception:
        cap = 128 << 20
    return int(min(cap * 3 // 4, 100 << 20))


# ----------------------------------------------------------------------------
# Pallas kernel: (tile_s*T, Tk) @ (Tk, tile_l) matmul + one-pass unbiased std.
# ----------------------------------------------------------------------------

def _persudo_ft_kernel(m_ref, x_ref, sc_ref, o_ref, *, tile_s, t_len, inv_t, inv_nm1):
    # m_ref: (tile_s*T, Tk) bf16/int8 ; x_ref: (Tk, tile_l) bf16
    # sc_ref: (tile_s, 1) f32         ; o_ref: (tile_s, tile_l) f32
    m = m_ref[...].astype(jnp.bfloat16)               # no-op for bf16, dequant-cast for int8
    y = jnp.dot(m, x_ref[...],
                preferred_element_type=jnp.float32)   # (tile_s*T, tile_l) f32
    y3 = y.reshape(tile_s, t_len, y.shape[-1])        # (tile_s, T, tile_l)
    s1 = jnp.sum(y3, axis=1)                          # (tile_s, tile_l)
    s2 = jnp.sum(y3 * y3, axis=1)                     # (tile_s, tile_l)
    mu = s1 * inv_t
    var = jnp.maximum(s2 - s1 * mu, 0.0) * inv_nm1    # one-pass var, clamped >= 0
    o_ref[...] = (jnp.sqrt(var) * sc_ref[...]).astype(o_ref.dtype)


def persudo_ft(x, widths=None, *, m_dtype="bfloat16"):
    """x: [N, T, C] or [T, C] -> [N, S, C] or [S, C] (float32).

    m_dtype: "bfloat16" (default) or "int8" (1-byte HBM storage of the constant
    CWT matrix; per-scale dequant is folded into the output, the MXU path stays
    bf16 so it works on every TPU generation).
    """
    widths = _default_widths() if widths is None else np.asarray(widths)
    widths_key = tuple(float(w) for w in np.asarray(widths).ravel())
    num_scales = len(widths_key)

    batched = (x.ndim == 3)
    if not batched:
        x = x[None]
    assert x.ndim == 3, "input must be 2d or 3d(batched) tensor"
    n, t_len, c = x.shape
    nc = n * c

    # ---- contraction dim: no 128-lane padding (only sublane-align to 8) ----
    tk = _round_up(t_len, 8)

    # ---- lane (N*C) tiling: >=256-wide tiles when the batch allows it ----
    if nc <= 512:
        tile_l = _round_up(nc, _LANE)
    else:
        tile_l = 512
    l_pad = _round_up(nc, tile_l)
    gs_l = l_pad // tile_l

    # ---- scale tiling: largest tile_s that fits the VMEM budget, but keep
    #      >= 4 total grid steps so DMAs pipeline / megacore has work ----
    m_el = 1 if m_dtype == "int8" else 2
    budget = _vmem_budget_bytes()
    total_units = _cdiv(num_scales, _SUBSCALES)
    unit_bytes = (_SUBSCALES * t_len * tk * m_el * 2      # M tile (double-buffered)
                  + _SUBSCALES * t_len * tile_l * 4       # f32 matmul intermediate (x1)
                  + _SUBSCALES * tile_l * 4 * 2)          # out tile (double-buffered)
    fixed_bytes = 2 * tk * tile_l * 2 + (4 << 20)         # RHS double-buffer + headroom
    units = max(1, min(total_units, (budget - fixed_bytes) // unit_bytes))
    target_steps = min(4, total_units * gs_l)
    while units > 1 and _cdiv(total_units, units) * gs_l < target_steps:
        units = max(1, units // 2)
    tile_s = units * _SUBSCALES
    gs_s = _cdiv(num_scales, tile_s)
    s_pad = gs_s * tile_s

    # ---- device operands (cached across calls) ----
    m_dev, sc_dev = _cached_operands(widths_key, t_len, tk, s_pad, m_dtype)

    # fold batch into the lane dim: (N, T, C) -> (T, N*C) -> pad to (Tk, l_pad)
    xt = jnp.transpose(x, (1, 0, 2)).reshape(t_len, nc).astype(jnp.bfloat16)
    xp = jnp.pad(xt, ((0, tk - t_len), (0, l_pad - nc)))

    # torch std(dim=1) is unbiased (ddof=1); t_len == 1 gives NaN in torch —
    # here we guard the divisor (result would be 0 instead of NaN).
    inv_nm1 = 1.0 / float(max(t_len - 1, 1))
    inv_t = 1.0 / float(t_len)

    kernel = functools.partial(_persudo_ft_kernel, tile_s=tile_s, t_len=t_len,
                               inv_t=inv_t, inv_nm1=inv_nm1)

    # scoped VMEM request derived from the chosen tiles (y counted once)
    m_tile_b = tile_s * t_len * tk * m_el
    x_tile_b = tk * tile_l * 2
    o_tile_b = tile_s * tile_l * 4
    sc_tile_b = tile_s * _LANE * 4
    y_b = tile_s * t_len * tile_l * 4
    need = 2 * (m_tile_b + x_tile_b + o_tile_b + sc_tile_b) + y_b + (4 << 20)
    vmem_limit = int(min(max(need, 16 << 20), budget))

    flops = 2 * (s_pad * t_len) * tk * l_pad
    bytes_accessed = (s_pad * t_len * tk * m_el        # M streamed once
                      + gs_s * tk * l_pad * 2          # RHS re-read per scale tile
                      + s_pad * l_pad * 4)             # output

    out = pl.pallas_call(
        kernel,
        out_shape=jax.ShapeDtypeStruct((s_pad, l_pad), jnp.float32),
        grid_spec=pltpu.PrefetchScalarGridSpec(
            num_scalar_prefetch=0,
            grid=(gs_s, gs_l),          # lane axis inner -> M block not re-DMA'd
            in_specs=[
                pl.BlockSpec((tile_s * t_len, tk), lambda i, j: (i, 0)),
                pl.BlockSpec((tk, tile_l), lambda i, j: (0, j)),
                pl.BlockSpec((tile_s, 1), lambda i, j: (i, 0)),
            ],
            out_specs=pl.BlockSpec((tile_s, tile_l), lambda i, j: (i, j)),
        ),
        compiler_params=pltpu.CompilerParams(
            dimension_semantics=("parallel", "parallel"),
            vmem_limit_bytes=vmem_limit),
        cost_estimate=pl.CostEstimate(flops=flops, transcendentals=0,
                                      bytes_accessed=bytes_accessed),
    )(m_dev, xp, sc_dev)

    res = out[:num_scales, :nc].reshape(num_scales, n, c)   # (S, N, C)
    res = jnp.transpose(res, (1, 0, 2))                     # (N, S, C)
    return res if batched else res[0]


# ----------------------------------------------------------------------------
# Pure-numpy reference (same math as pywt.cwt + permute + unbiased std).
# ----------------------------------------------------------------------------

def _reference_numpy(x_np, widths):
    int_psi, xg = _morlet_int_psi()
    n, t_len, c = x_np.shape
    per_scale = []
    for scale in np.asarray(widths).ravel():
        scale = float(scale)
        filt = _scale_filter(int_psi, xg, scale)
        coefs = np.empty((n, t_len, c))
        for b in range(n):
            for ch in range(c):
                conv = np.convolve(x_np[b, :, ch], filt)
                coef = -np.sqrt(scale) * np.diff(conv)
                d = (coef.shape[-1] - t_len) / 2.0
                if d > 0:
                    coef = coef[int(np.floor(d)):-int(np.ceil(d))]
                coefs[b, :, ch] = coef
        per_scale.append(coefs)
    out = np.stack(per_scale, axis=0)            # (S, N, T, C)
    out = np.transpose(out, (1, 2, 0, 3))        # (N, T, S, C)
    return out.std(axis=1, ddof=1)               # (N, S, C)


if __name__ == "__main__":
    key = jax.random.PRNGKey(0)
    N, T, C = 2, 16, 4
    x = jax.random.normal(key, (N, T, C), dtype=jnp.float32)
    widths = _default_widths()

    out = jax.block_until_ready(persudo_ft(x, widths))

    ref = _reference_numpy(np.asarray(x, dtype=np.float64), widths)
    assert out.shape == (N, len(widths), C), out.shape
    # Kernel uses bf16 MXU operands (f32 accumulation) vs. a float64 reference.
    np.testing.assert_allclose(np.asarray(out), ref, rtol=5e-2, atol=2e-3)
    print("KERNEL_OK")
</pallas_src>

<mosaic_0001>
module attributes {stable_mosaic.version = 11 : i64} {
  func.func @_persudo_ft_kernel(%arg0: i32, %arg1: i32, %arg2: memref<128x16xbf16, #tpu.memory_space<vmem>>, %arg3: memref<16x128xbf16, #tpu.memory_space<vmem>>, %arg4: memref<8x1xf32, #tpu.memory_space<vmem>>, %arg5: memref<8x128xf32, #tpu.memory_space<vmem>>) attributes {dimension_semantics = [#tpu.dimension_semantics<parallel>, #tpu.dimension_semantics<parallel>], iteration_bounds = array<i64: 4, 1>, scalar_prefetch = 0 : i64, scratch_operands = 0 : i64, tpu.core_type = #tpu.core_type<tc>, window_params = [{transform_indices = @transform_0, window_bounds = array<i64: 128, 16>}, {transform_indices = @transform_1, window_bounds = array<i64: 16, 128>}, {transform_indices = @transform_2, window_bounds = array<i64: 8, 1>}, {transform_indices = @transform_3, window_bounds = array<i64: 8, 128>}]} {
    %c0 = arith.constant 0 : index
    %c0_0 = arith.constant 0 : index
    %0 = vector.load %arg2[%c0, %c0_0] : memref<128x16xbf16, #tpu.memory_space<vmem>>, vector<128x16xbf16>
    %c0_1 = arith.constant 0 : index
    %c0_2 = arith.constant 0 : index
    %1 = vector.load %arg3[%c0_1, %c0_2] : memref<16x128xbf16, #tpu.memory_space<vmem>>, vector<16x128xbf16>
    %cst = arith.constant dense<0.000000e+00> : vector<128x128xf32>
    %2 = tpu.matmul %0, %1, %cst {dimension_numbers = #tpu.dot_dimension_numbers<[1], [0], [0], [1], [0, 0, 1, 1], [], []>} : vector<128x16xbf16>, vector<16x128xbf16>, vector<128x128xf32> -> vector<128x128xf32>
    %3 = vector.shape_cast %2 : vector<128x128xf32> to vector<8x16x128xf32>
    %cst_3 = arith.constant dense<0.000000e+00> : vector<8x128xf32>
    %4 = vector.multi_reduction <add>, %3, %cst_3 [1] : vector<8x16x128xf32> to vector<8x128xf32>
    %5 = arith.mulf %3, %3 : vector<8x16x128xf32>
    %cst_4 = arith.constant dense<0.000000e+00> : vector<8x128xf32>
    %6 = vector.multi_reduction <add>, %5, %cst_4 [1] : vector<8x16x128xf32> to vector<8x128xf32>
    %cst_5 = arith.constant 6.250000e-02 : f32
    %7 = vector.broadcast %cst_5 : f32 to vector<8x128xf32>
    %8 = arith.mulf %4, %7 : vector<8x128xf32>
    %9 = arith.mulf %4, %8 : vector<8x128xf32>
    %10 = arith.subf %6, %9 : vector<8x128xf32>
    %cst_6 = arith.constant 0.000000e+00 : f32
    %11 = vector.broadcast %cst_6 : f32 to vector<8x128xf32>
    %12 = arith.maximumf %10, %11 : vector<8x128xf32>
    %cst_7 = arith.constant 0.0666666701 : f32
    %13 = vector.broadcast %cst_7 : f32 to vector<8x128xf32>
    %14 = arith.mulf %12, %13 : vector<8x128xf32>
    %15 = math.sqrt %14 : vector<8x128xf32>
    %c0_8 = arith.constant 0 : index
    %c0_9 = arith.constant 0 : index
    %16 = vector.load %arg4[%c0_8, %c0_9] : memref<8x1xf32, #tpu.memory_space<vmem>>, vector<8x1xf32>
    %17 = vector.broadcast %16 : vector<8x1xf32> to vector<8x128xf32>
    %18 = arith.mulf %15, %17 : vector<8x128xf32>
    %c0_10 = arith.constant 0 : index
    %c0_11 = arith.constant 0 : index
    %19 = vector.load %arg5[%c0_10, %c0_11] : memref<8x128xf32, #tpu.memory_space<vmem>>, vector<8x128xf32>
    tpu.vector_store %arg5[%c0_10, %c0_11], %18 {strides = array<i32>} : memref<8x128xf32, #tpu.memory_space<vmem>>, vector<8x128xf32>,
    return
  }
  func.func @transform_0(%arg0: i32, %arg1: i32) -> (i32, i32) {
    %c0_i32 = arith.constant 0 : i32
    %c0_i32_0 = arith.constant 0 : i32
    return %arg0, %c0_i32 : i32, i32
  }
  func.func @transform_1(%arg0: i32, %arg1: i32) -> (i32, i32) {
    %c0_i32 = arith.constant 0 : i32
    %c0_i32_0 = arith.constant 0 : i32
    return %c0_i32, %arg1 : i32, i32
  }
  func.func @transform_2(%arg0: i32, %arg1: i32) -> (i32, i32) {
    %c0_i32 = arith.constant 0 : i32
    %c0_i32_0 = arith.constant 0 : i32
    return %arg0, %c0_i32 : i32, i32
  }
  func.func @transform_3(%arg0: i32, %arg1: i32) -> (i32, i32) {
    %c0_i32 = arith.constant 0 : i32
    return %arg0, %arg1 : i32, i32
  }
}

</mosaic_0001>

<llo_original>
// kernel: tpu_custom_call.1
$region0: #{tpu_custom_call.1}
  #allocation0 [shape = 'u32[]', space=smem, size = 0x4, offset = 0x4, fixed_abs, tag = 'smem constant byte address 0x4 - core index']
  #allocation1 [shape = 'u32[144,128]{1,0:T(1,128)}', space=vmem, size = 0x12000, scoped, tag = 'internal scratch']
  %s0 = inlined_call_operand.vmem [shape: bf16[512,16], index: 0, kind: input, shape index: {}]
  %s1 = inlined_call_operand.vmem [shape: bf16[16,128], index: 1, kind: input, shape index: {}]
  %s2 = inlined_call_operand.vmem [shape: f32[32,1], index: 2, kind: input, shape index: {}]
  %s3 = inlined_call_operand.hbm [shape: f32[32,128], index: 3, kind: output, shape index: {}]
  %s4 = sld [smem:[#allocation0]]
  $region45: #{tpu_custom_call.1} parent=0
    _
  %s6 = ssub.s32 1, %s4
  %s7 = scalar_select 0, %s6, %s4
  $region1: #{tpu_custom_call.1} parent=0
    #allocation2 [shape = 'u8[8192]{0}', space=vmem, size = 0x2000, scoped, tag = 'output window, operand 0']
    #allocation3 [shape = 's32[2]{0}', space=sflag, size = 0x8, scoped, tag = 'scoped memory for tpu_custom_call.1']
    %8 = vsyncpa [#allocation3], 0
    %s9 = scalar_lea.sflag [#allocation3], 1
    %10 = vsyncpa %s9, 0
    loop: start=0, step=1, limit=6
    $region2: #{tpu_custom_call.1} parent=1 // loop_pre_header
      _
    $region3: #{tpu_custom_call.1} parent=1 // loop_header
      %s12 = sphi 0, %s16
      %p13 = scmp.ge.s32.totalorder %s12, 6
      %s19 = sphi 0, %s31
      %s20 = sphi 0, %s27
      %s21 = sphi 0, %s19
      %s22 = sphi 0, %s20
      %s23 = sphi 0, %s21
      %s24 = sphi 0, %s22
      %s34 = sphi 0, %s36
      %s37 = sphi 0, %s34
      %s38 = sphi 0, %s37
      %s54 = sphi 0, %s38
      %s60 = sphi 0, %s62
      %s63 = sphi 0, %s60
      %s64 = sphi 0, %s63
      %s80 = sphi 0, %s64
      %s86 = sphi 0, %s88
      %s89 = sphi 0, %s86
      %s90 = sphi 0, %s89
      %s106 = sphi 0, %s90
      %s114 = sphi 0, %s116
      %s117 = sphi 0, %s114
      %s118 = sphi 0, %s117
      %s134 = sphi 0, %s118
    $region4: #{tpu_custom_call.1} parent=1 // loop_header_branch
      %15 = sbr.rel (%p13) target = $region8
    $region5: #{tpu_custom_call.1} parent=1 // loop_body
      %s17 = ssub.s32 %s12, 1
      %s18 = ssub.s32 %s12, 2
      %s25 = sadd.s32 1, %s20
      %p26 = scmp.ge.s32.totalorder %s25, 1
      %s27 = scalar_select %p26, 0, %s25
      %s28 = sadd.s32 1, %s19
      %s29 = scalar_select %p26, %s28, %s19
      %p30 = scmp.ge.s32.totalorder %s29, 4
      %s31 = scalar_select %p30, 0, %s29
      %s32 = ssub.s32 %s19, %s31
      %p33 = scmp.eq.s32.totalorder %s32, 0
      %s35 = sadd.s32 %s34, 1
      %s36 = scalar_select %p33, %s34, %s35
      %p39 = pneg %p33
      %p40 = scmp.eq.s32.totalorder %s12, 3
      %p41 = por %p39, %p40
      %p42 = scmp.ne.s32.totalorder %s34, %s37
      %p43 = scmp.eq.s32.totalorder %s12, 0
      %p44 = por %p42, %p43
      %p45 = scmp.ne.s32.totalorder %s34, %s37
      %p46 = scmp.eq.s32.totalorder %s17, 3
      %p47 = por %p45, %p46
      %p48 = scmp.ne.s32.totalorder %s37, %s38
      %p49 = scmp.eq.s32.totalorder %s17, 0
      %p50 = por %p48, %p49
      %p51 = scmp.ne.s32.totalorder %s37, %s38
      %p52 = scmp.eq.s32.totalorder %s18, 3
      %p53 = por %p51, %p52
      %p55 = scmp.ne.s32.totalorder %s38, %s54
      %p56 = scmp.eq.s32.totalorder %s18, 0
      %p57 = por %p55, %p56
      %s58 = ssub.s32 %s20, %s27
      %p59 = scmp.eq.s32.totalorder %s58, 0
      %s61 = sadd.s32 %s60, 1
      %s62 = scalar_select %p59, %s60, %s61
      %p65 = pneg %p59
      %p66 = scmp.eq.s32.totalorder %s12, 3
      %p67 = por %p65, %p66
      %p68 = scmp.ne.s32.totalorder %s60, %s63
      %p69 = scmp.eq.s32.totalorder %s12, 0
      %p70 = por %p68, %p69
      %p71 = scmp.ne.s32.totalorder %s60, %s63
      %p72 = scmp.eq.s32.totalorder %s17, 3
      %p73 = por %p71, %p72
      %p74 = scmp.ne.s32.totalorder %s63, %s64
      %p75 = scmp.eq.s32.totalorder %s17, 0
      %p76 = por %p74, %p75
      %p77 = scmp.ne.s32.totalorder %s63, %s64
      %p78 = scmp.eq.s32.totalorder %s18, 3
      %p79 = por %p77, %p78
      %p81 = scmp.ne.s32.totalorder %s64, %s80
      %p82 = scmp.eq.s32.totalorder %s18, 0
      %p83 = por %p81, %p82
      %s84 = ssub.s32 %s19, %s31
      %p85 = scmp.eq.s32.totalorder %s84, 0
      %s87 = sadd.s32 %s86, 1
      %s88 = scalar_select %p85, %s86, %s87
      %p91 = pneg %p85
      %p92 = scmp.eq.s32.totalorder %s12, 3
      %p93 = por %p91, %p92
      %p94 = scmp.ne.s32.totalorder %s86, %s89
      %p95 = scmp.eq.s32.totalorder %s12, 0
      %p96 = por %p94, %p95
      %p97 = scmp.ne.s32.totalorder %s86, %s89
      %p98 = scmp.eq.s32.totalorder %s17, 3
      %p99 = por %p97, %p98
      %p100 = scmp.ne.s32.totalorder %s89, %s90
      %p101 = scmp.eq.s32.totalorder %s17, 0
      %p102 = por %p100, %p101
      %p103 = scmp.ne.s32.totalorder %s89, %s90
      %p104 = scmp.eq.s32.totalorder %s18, 3
      %p105 = por %p103, %p104
      %p107 = scmp.ne.s32.totalorder %s90, %s106
      %p108 = scmp.eq.s32.totalorder %s18, 0
      %p109 = por %p107, %p108
      %s110 = ssub.s32 %s19, %s31
      %s111 = ssub.s32 %s20, %s27
      %s112 = sor.u32 %s110, %s111
      %p113 = scmp.eq.s32.totalorder %s112, 0
      %s115 = sadd.s32 %s114, 1
      %s116 = scalar_select %p113, %s114, %s115
      %p119 = pneg %p113
      %p120 = scmp.eq.s32.totalorder %s12, 3
      %p121 = por %p119, %p120
      %p122 = scmp.ne.s32.totalorder %s114, %s117
      %p123 = scmp.eq.s32.totalorder %s12, 0
      %p124 = por %p122, %p123
      %p125 = scmp.ne.s32.totalorder %s114, %s117
      %p126 = scmp.eq.s32.totalorder %s17, 3
      %p127 = por %p125, %p126
      %p128 = scmp.ne.s32.totalorder %s117, %s118
      %p129 = scmp.eq.s32.totalorder %s17, 0
      %p130 = por %p128, %p129
      %p131 = scmp.ne.s32.totalorder %s117, %s118
      %p132 = scmp.eq.s32.totalorder %s18, 3
      %p133 = por %p131, %p132
      %p135 = scmp.ne.s32.totalorder %s118, %s134
      %p136 = scmp.eq.s32.totalorder %s18, 0
      %p137 = por %p135, %p136
      %p138 = scmp.le.s32.totalorder 1, %s12
      %p139 = scmp.lt.s32.totalorder %s12, 5
      %p140 = pnand %p138, %p139
      %p141 = pneg %p140
      // Predicated region
      $region9: #{tpu_custom_call.1} parent=5 // pred_check
        _
      $region10: #{tpu_custom_call.1} parent=5 // pred_check_branch
        %143 = sbr.rel (%p140) target = $region12
      $region11: #{tpu_custom_call.1} parent=5 // pred_region
        %s144 = ssub.s32 %s12, 1
        // Predicated region
        $region13: #{tpu_custom_call.1} parent=11 // pred_check
          %p145 = pneg %p76
        $region14: #{tpu_custom_call.1} parent=11 // pred_check_branch
          %147 = sbr.rel (%p145) target = $region16
        $region15: #{tpu_custom_call.1} parent=11 // pred_region
          %p148 = scmp.lt.s32.totalorder %s22, 0
          %s149 = scalar_select %p148, %s22, 0
          %s150 = smul.addr %s149, 4
          %s151 = scalar_lea.vmem %s1, %s150
        $region16: #{tpu_custom_call.1} parent=11 // pred_fallthru
          _
      $region12: #{tpu_custom_call.1} parent=5 // pred_fallthru
        _
      %p152 = scmp.lt.s32.totalorder %s12, 4
      // Predicated region
      $region17: #{tpu_custom_call.1} parent=5 // pred_check
        %p153 = pneg %p152
      $region18: #{tpu_custom_call.1} parent=5 // pred_check_branch
        %155 = sbr.rel (%p153) target = $region20
      $region19: #{tpu_custom_call.1} parent=5 // pred_region
        // Predicated region
        $region21: #{tpu_custom_call.1} parent=19 // pred_check
          %p156 = pneg %p44
        $region22: #{tpu_custom_call.1} parent=19 // pred_check_branch
          %158 = sbr.rel (%p156) target = $region24
        $region23: #{tpu_custom_call.1} parent=19 // pred_region
          %s159 = smul.u32 16, %s19
          %p160 = scmp.lt.s32.totalorder %s159, 63
          %s161 = scalar_select %p160, %s159, 63
          %s162 = smul.addr %s161, 4
          %s163 = scalar_lea.vmem %s0, %s162
          %s164 = smul.u32 16, %s19
        $region24: #{tpu_custom_call.1} parent=19 // pred_fallthru
          _
        // Predicated region
        $region25: #{tpu_custom_call.1} parent=19 // pred_check
          %p165 = pneg %p96
        $region26: #{tpu_custom_call.1} parent=19 // pred_check_branch
          %167 = sbr.rel (%p165) target = $region28
        $region27: #{tpu_custom_call.1} parent=19 // pred_region
          %p168 = scmp.lt.s32.totalorder %s19, 3
          %s169 = scalar_select %p168, %s19, 3
          %s170 = smul.addr %s169, 8
          %s171 = scalar_lea.vmem %s2, %s170
        $region28: #{tpu_custom_call.1} parent=19 // pred_fallthru
          _
      $region20: #{tpu_custom_call.1} parent=5 // pred_fallthru
        _
      %p172 = scmp.le.s32.totalorder 1, %s12
      %p173 = scmp.lt.s32.totalorder %s12, 5
      %p174 = pnand %p172, %p173
      %p175 = pneg %p174
      // Predicated region
      $region29: #{tpu_custom_call.1} parent=5 // pred_check
        _
      $region30: #{tpu_custom_call.1} parent=5 // pred_check_branch
        %177 = sbr.rel (%p174) target = $region32
      $region31: #{tpu_custom_call.1} parent=5 // pred_region
        %s178 = ssub.s32 %s12, 1
        %s179 = smul.u32 16, %s21
        %p180 = scmp.lt.s32.totalorder %s179, 63
        %s181 = scalar_select %p180, %s179, 63
        %s182 = smul.addr %s181, 4
        %s183 = scalar_lea.vmem %s0, %s182
        %p184 = pneg %p50
        %p185 = pneg %p47
        %p186 = scmp.lt.s32.totalorder %s22, 0
        %s187 = scalar_select %p186, %s22, 0
        %s188 = smul.addr %s187, 4
        %s189 = scalar_lea.vmem %s1, %s188
        %p190 = pneg %p76
        %p191 = pneg %p73
        %p192 = scmp.lt.s32.totalorder %s21, 3
        %s193 = scalar_select %p192, %s21, 3
        %s194 = smul.addr %s193, 8
        %s195 = scalar_lea.vmem %s2, %s194
        %p196 = pneg %p102
        %p197 = pneg %p99
        %p198 = pneg %p130
        %p199 = pneg %p127
        %s200 = sand.u32 %s117, 1
        %s201 = scalar_lea.sflag [#allocation3], %s200
        %s202 = sand.u32 %s117, 1
        %s203 = smul.addr %s202, 8
        %s204 = scalar_lea.vmem [#allocation2], %s203
        %s205 = smul.u32 16, %s21
        %p206 = scmp.lt.s32.totalorder %s205, 63
        %s207 = scalar_select %p206, %s205, 63
        %s208 = smul.addr %s207, 4
        %s209 = scalar_lea.vmem %s0, %s208
        %s210 = smul.u32 16, %s21
        %p211 = scmp.lt.s32.totalorder %s22, 0
        %s212 = scalar_select %p211, %s22, 0
        %s213 = smul.addr %s212, 4
        %s214 = scalar_lea.vmem %s1, %s213
        %p215 = scmp.lt.s32.totalorder %s21, 3
        %s216 = scalar_select %p215, %s21, 3
        %s217 = smul.addr %s216, 8
        %s218 = scalar_lea.vmem %s2, %s217
        %v220 = vld [vmem:[%s209] sm:$0xf]
        %v221 = vld [vmem:[%s209 + $0x4] sm:$0xf]
        %v222 = vld [vmem:[%s209 + $0x8] sm:$0xf]
        %v223 = vld [vmem:[%s209 + $0xc] sm:$0xf]
        %v224 = vld [vmem:[%s209 + $0x10] sm:$0xf]
        %v225 = vld [vmem:[%s209 + $0x14] sm:$0xf]
        %v226 = vld [vmem:[%s209 + $0x18] sm:$0xf]
        %v227 = vld [vmem:[%s209 + $0x1c] sm:$0xf]
        %v228 = vld [vmem:[%s209 + $0x20] sm:$0xf]
        %v229 = vld [vmem:[%s209 + $0x24] sm:$0xf]
        %v230 = vld [vmem:[%s209 + $0x28] sm:$0xf]
        %v231 = vld [vmem:[%s209 + $0x2c] sm:$0xf]
        %v232 = vld [vmem:[%s209 + $0x30] sm:$0xf]
        %v233 = vld [vmem:[%s209 + $0x34] sm:$0xf]
        %v234 = vld [vmem:[%s209 + $0x38] sm:$0xf]
        %v235 = vld [vmem:[%s209 + $0x3c] sm:$0xf]
        %v236 = vld [vmem:[%s214] sm:$0xf]
        %v237 = vld [vmem:[%s214 + $0x4] sm:$0xf]
        %v254 = vunpack.c.l.b16 %v220
        %v255 = vunpack.c.l.b16 %v221
        %v256 = vunpack.c.l.b16 %v222
        %v257 = vunpack.c.l.b16 %v223
        %v258 = vunpack.c.l.b16 %v224
        %v259 = vunpack.c.l.b16 %v225
        %v260 = vunpack.c.l.b16 %v226
        %v261 = vunpack.c.l.b16 %v227
        %v262 = vunpack.c.l.b16 %v228
        %v263 = vunpack.c.l.b16 %v229
        %v264 = vunpack.c.l.b16 %v230
        %v265 = vunpack.c.l.b16 %v231
        %v266 = vunpack.c.l.b16 %v232
        %v267 = vunpack.c.l.b16 %v233
        %v268 = vunpack.c.l.b16 %v234
        %v269 = vunpack.c.l.b16 %v235
        %v270 = vpack.c.b16 %v255, %v254
        %v271 = vpack.c.b16 %v257, %v256
        %v272 = vpack.c.b16 %v259, %v258
        %v273 = vpack.c.b16 %v261, %v260
        %v274 = vpack.c.b16 %v263, %v262
        %v275 = vpack.c.b16 %v265, %v264
        %v276 = vpack.c.b16 %v267, %v266
        %v277 = vpack.c.b16 %v269, %v268
        %v280 = vunpack.c.l.b16 %v236
        %v281 = vunpack.c.l.b16 %v237
        %v282 = vpack.c.b16 %v281, %v280
        %vm284 = vcmask 130048
        %v286 = vsel %vm284, %v270, 0
        %v289 = vsel %vm284, %v271, 0
        %v292 = vsel %vm284, %v272, 0
        %v295 = vsel %vm284, %v273, 0
        %v298 = vsel %vm284, %v274, 0
        %v301 = vsel %vm284, %v275, 0
        %v304 = vsel %vm284, %v276, 0
        %v307 = vsel %vm284, %v277, 0
        %309 = vmatprep.subr.bf16.mxu0 0
        %310 = vmatpush1.bf16.msra.mxu0 0
        %311 = vmatprep.subr.bf16.mxu0 0
        %312 = vmatpush1.bf16.msra.mxu0 0
        %313 = vmatprep.subr.bf16.mxu0 0
        %314 = vmatpush1.bf16.msra.mxu0 0
        %315 = vmatprep.subr.bf16.mxu0 0
        %316 = vmatpush1.bf16.msra.mxu0 0
        %317 = vmatprep.subr.bf16.mxu0 0
        %318 = vmatpush1.bf16.msra.mxu0 0
        %319 = vmatprep.subr.bf16.mxu0 0
        %320 = vmatpush1.bf16.msra.mxu0 0
        %321 = vmatprep.subr.bf16.mxu0 0
        %322 = vmatpush1.bf16.msra.mxu0 0
        %323 = vmatprep.subr.bf16.mxu0 0
        %324 = vmatpush1.bf16.msra.mxu0 %v282
        %325 = vmatprep.subr.bf16.mxu0 0
        %326 = vmatpush2.bf16.msra.mxu0 0
        %327 = vmatprep.subr.bf16.mxu0 0
        %328 = vmatpush2.bf16.msra.mxu0 0
        %329 = vmatprep.subr.bf16.mxu0 0
        %330 = vmatpush2.bf16.msra.mxu0 0
        %331 = vmatprep.subr.bf16.mxu0 0
        %332 = vmatpush2.bf16.msra.mxu0 0
        %333 = vmatprep.subr.bf16.mxu0 0
        %334 = vmatpush2.bf16.msra.mxu0 0
        %335 = vmatprep.subr.bf16.mxu0 0
        %336 = vmatpush2.bf16.msra.mxu0 0
        %337 = vmatprep.subr.bf16.mxu0 0
        %338 = vmatpush2.bf16.msra.mxu0 0
        %339 = vmatprep.subr.bf16.mxu0 0
        %340 = vmatpush2.bf16.msra.mxu0 0
        %341 = vmatprep.mubr.bf16.mxu0 0
        %342 = vmatmul.mubr.bf16.gmra.mxu0 %v286
        %v343 = vpop.f32.mrf.mxu0
        %v344 = vadd.f32 0.0, %v343
        %v345 = vpop.f32.mrf.mxu0
        %v346 = vpop.f32.mrf.mxu0
        %v347 = vadd.f32 0.0, %v346
        %v348 = vpop.f32.mrf.mxu0
        %349 = vmatprep.mubr.bf16.mxu0 0
        %350 = vmatmul.mubr.bf16.gmra.mxu0 %v289
        %v351 = vpop.f32.mrf.mxu0
        %v352 = vadd.f32 0.0, %v351
        %v353 = vpop.f32.mrf.mxu0
        %v354 = vpop.f32.mrf.mxu0
        %v355 = vadd.f32 0.0, %v354
        %v356 = vpop.f32.mrf.mxu0
        %357 = vmatprep.mubr.bf16.mxu0 0
        %358 = vmatmul.mubr.bf16.gmra.mxu0 %v292
        %v359 = vpop.f32.mrf.mxu0
        %v360 = vadd.f32 0.0, %v359
        %v361 = vpop.f32.mrf.mxu0
        %v362 = vpop.f32.mrf.mxu0
        %v363 = vadd.f32 0.0, %v362
        %v364 = vpop.f32.mrf.mxu0
        %365 = vmatprep.mubr.bf16.mxu0 0
        %366 = vmatmul.mubr.bf16.gmra.mxu0 %v295
        %v367 = vpop.f32.mrf.mxu0
        %v368 = vadd.f32 0.0, %v367
        %v369 = vpop.f32.mrf.mxu0
        %v370 = vpop.f32.mrf.mxu0
        %v371 = vadd.f32 0.0, %v370
        %v372 = vpop.f32.mrf.mxu0
        %373 = vmatprep.mubr.bf16.mxu0 0
        %374 = vmatmul.mubr.bf16.gmra.mxu0 %v298
        %v375 = vpop.f32.mrf.mxu0
        %v376 = vadd.f32 0.0, %v375
        %v377 = vpop.f32.mrf.mxu0
        %v378 = vpop.f32.mrf.mxu0
        %v379 = vadd.f32 0.0, %v378
        %v380 = vpop.f32.mrf.mxu0
        %381 = vmatprep.mubr.bf16.mxu0 0
        %382 = vmatmul.mubr.bf16.gmra.mxu0 %v301
        %v383 = vpop.f32.mrf.mxu0
        %v384 = vadd.f32 0.0, %v383
        %v385 = vpop.f32.mrf.mxu0
        %v386 = vpop.f32.mrf.mxu0
        %v387 = vadd.f32 0.0, %v386
        %v388 = vpop.f32.mrf.mxu0
        %389 = vmatprep.mubr.bf16.mxu0 0
        %390 = vmatmul.mubr.bf16.gmra.mxu0 %v304
        %v391 = vpop.f32.mrf.mxu0
        %v392 = vadd.f32 0.0, %v391
        %v393 = vpop.f32.mrf.mxu0
        %v394 = vpop.f32.mrf.mxu0
        %v395 = vadd.f32 0.0, %v394
        %v396 = vpop.f32.mrf.mxu0
        %397 = vmatprep.mubr.bf16.mxu0 0
        %398 = vmatmul.mubr.bf16.gmra.mxu0 %v307
        %v399 = vpop.f32.mrf.mxu0
        %v400 = vadd.f32 0.0, %v399
        %v401 = vpop.f32.mrf.mxu0
        %v402 = vpop.f32.mrf.mxu0
        %v403 = vadd.f32 0.0, %v402
        %v404 = vpop.f32.mrf.mxu0
        %405 = vdwg.mxu0
        %v406 = vadd.f32 %v344, %v347
        %v407 = vrot.slane %v406, 4
        %v408 = vadd.f32 %v406, %v407
        %v409 = vrot.slane %v408, 2
        %v410 = vadd.f32 %v408, %v409
        %v411 = vrot.slane %v410, 1
        %v412 = vadd.f32 %v410, %v411
        %v413 = vadd.f32 %v352, %v355
        %v414 = vrot.slane %v413, 4
        %v415 = vadd.f32 %v413, %v414
        %v416 = vrot.slane %v415, 2
        %v417 = vadd.f32 %v415, %v416
        %v418 = vrot.slane %v417, 1
        %v419 = vadd.f32 %v417, %v418
        %v420 = vadd.f32 %v360, %v363
        %v421 = vrot.slane %v420, 4
        %v422 = vadd.f32 %v420, %v421
        %v423 = vrot.slane %v422, 2
        %v424 = vadd.f32 %v422, %v423
        %v425 = vrot.slane %v424, 1
        %v426 = vadd.f32 %v424, %v425
        %v427 = vadd.f32 %v368, %v371
        %v428 = vrot.slane %v427, 4
        %v429 = vadd.f32 %v427, %v428
        %v430 = vrot.slane %v429, 2
        %v431 = vadd.f32 %v429, %v430
        %v432 = vrot.slane %v431, 1
        %v433 = vadd.f32 %v431, %v432
        %v434 = vadd.f32 %v376, %v379
        %v435 = vrot.slane %v434, 4
        %v436 = vadd.f32 %v434, %v435
        %v437 = vrot.slane %v436, 2
        %v438 = vadd.f32 %v436, %v437
        %v439 = vrot.slane %v438, 1
        %v440 = vadd.f32 %v438, %v439
        %v441 = vadd.f32 %v384, %v387
        %v442 = vrot.slane %v441, 4
        %v443 = vadd.f32 %v441, %v442
        %v444 = vrot.slane %v443, 2
        %v445 = vadd.f32 %v443, %v444
        %v446 = vrot.slane %v445, 1
        %v447 = vadd.f32 %v445, %v446
        %v448 = vadd.f32 %v392, %v395
        %v449 = vrot.slane %v448, 4
        %v450 = vadd.f32 %v448, %v449
        %v451 = vrot.slane %v450, 2
        %v452 = vadd.f32 %v450, %v451
        %v453 = vrot.slane %v452, 1
        %v454 = vadd.f32 %v452, %v453
        %v455 = vadd.f32 %v400, %v403
        %v456 = vrot.slane %v455, 4
        %v457 = vadd.f32 %v455, %v456
        %v458 = vrot.slane %v457, 2
        %v459 = vadd.f32 %v457, %v458
        %v460 = vrot.slane %v459, 1
        %v461 = vadd.f32 %v459, %v460
        %v462 = vmul.f32 %v344, %v344
        %v463 = vmul.f32 %v347, %v347
        %v464 = vmul.f32 %v352, %v352
        %v465 = vmul.f32 %v355, %v355
        %v466 = vmul.f32 %v360, %v360
        %v467 = vmul.f32 %v363, %v363
        %v468 = vmul.f32 %v368, %v368
        %v469 = vmul.f32 %v371, %v371
        %v470 = vmul.f32 %v376, %v376
        %v471 = vmul.f32 %v379, %v379
        %v472 = vmul.f32 %v384, %v384
        %v473 = vmul.f32 %v387, %v387
        %v474 = vmul.f32 %v392, %v392
        %v475 = vmul.f32 %v395, %v395
        %v476 = vmul.f32 %v400, %v400
        %v477 = vmul.f32 %v403, %v403
        %v478 = vadd.f32 %v462, %v463
        %v479 = vrot.slane %v478, 4
        %v480 = vadd.f32 %v478, %v479
        %v481 = vrot.slane %v480, 2
        %v482 = vadd.f32 %v480, %v481
        %v483 = vrot.slane %v482, 1
        %v484 = vadd.f32 %v482, %v483
        %v485 = vadd.f32 %v464, %v465
        %v486 = vrot.slane %v485, 4
        %v487 = vadd.f32 %v485, %v486
        %v488 = vrot.slane %v487, 2
        %v489 = vadd.f32 %v487, %v488
        %v490 = vrot.slane %v489, 1
        %v491 = vadd.f32 %v489, %v490
        %v492 = vadd.f32 %v466, %v467
        %v493 = vrot.slane %v492, 4
        %v494 = vadd.f32 %v492, %v493
        %v495 = vrot.slane %v494, 2
        %v496 = vadd.f32 %v494, %v495
        %v497 = vrot.slane %v496, 1
        %v498 = vadd.f32 %v496, %v497
        %v499 = vadd.f32 %v468, %v469
        %v500 = vrot.slane %v499, 4
        %v501 = vadd.f32 %v499, %v500
        %v502 = vrot.slane %v501, 2
        %v503 = vadd.f32 %v501, %v502
        %v504 = vrot.slane %v503, 1
        %v505 = vadd.f32 %v503, %v504
        %v506 = vadd.f32 %v470, %v471
        %v507 = vrot.slane %v506, 4
        %v508 = vadd.f32 %v506, %v507
        %v509 = vrot.slane %v508, 2
        %v510 = vadd.f32 %v508, %v509
        %v511 = vrot.slane %v510, 1
        %v512 = vadd.f32 %v510, %v511
        %v513 = vadd.f32 %v472, %v473
        %v514 = vrot.slane %v513, 4
        %v515 = vadd.f32 %v513, %v514
        %v516 = vrot.slane %v515, 2
        %v517 = vadd.f32 %v515, %v516
        %v518 = vrot.slane %v517, 1
        %v519 = vadd.f32 %v517, %v518
        %v520 = vadd.f32 %v474, %v475
        %v521 = vrot.slane %v520, 4
        %v522 = vadd.f32 %v520, %v521
        %v523 = vrot.slane %v522, 2
        %v524 = vadd.f32 %v522, %v523
        %v525 = vrot.slane %v524, 1
        %v526 = vadd.f32 %v524, %v525
        %v527 = vadd.f32 %v476, %v477
        %v528 = vrot.slane %v527, 4
        %v529 = vadd.f32 %v527, %v528
        %v530 = vrot.slane %v529, 2
        %v531 = vadd.f32 %v529, %v530
        %v532 = vrot.slane %v531, 1
        %v533 = vadd.f32 %v531, %v532
        %v534 = vmul.f32 %v412, 0.0625
        %v535 = vmul.f32 %v419, 0.0625
        %v536 = vmul.f32 %v426, 0.0625
        %v537 = vmul.f32 %v433, 0.0625
        %v538 = vmul.f32 %v440, 0.0625
        %v539 = vmul.f32 %v447, 0.0625
        %v540 = vmul.f32 %v454, 0.0625
        %v541 = vmul.f32 %v461, 0.0625
        %v542 = vmul.f32 %v412, %v534
        %v543 = vmul.f32 %v419, %v535
        %v544 = vmul.f32 %v426, %v536
        %v545 = vmul.f32 %v433, %v537
        %v546 = vmul.f32 %v440, %v538
        %v547 = vmul.f32 %v447, %v539
        %v548 = vmul.f32 %v454, %v540
        %v549 = vmul.f32 %v461, %v541
        %v550 = vsub.f32 %v484, %v542
        %v551 = vsub.f32 %v491, %v543
        %v552 = vsub.f32 %v498, %v544
        %v553 = vsub.f32 %v505, %v545
        %v554 = vsub.f32 %v512, %v546
        %v555 = vsub.f32 %v519, %v547
        %v556 = vsub.f32 %v526, %v548
        %v557 = vsub.f32 %v533, %v549
        %v558 = vmax.f32 %v550, 0.0
        %v559 = vmax.f32 %v551, 0.0
        %v560 = vmax.f32 %v552, 0.0
        %v561 = vmax.f32 %v553, 0.0
        %v562 = vmax.f32 %v554, 0.0
        %v563 = vmax.f32 %v555, 0.0
        %v564 = vmax.f32 %v556, 0.0
        %v565 = vmax.f32 %v557, 0.0
        %v566 = vmul.f32 %v558, 0.06666667
        %v567 = vmul.f32 %v559, 0.06666667
        %v568 = vmul.f32 %v560, 0.06666667
        %v569 = vmul.f32 %v561, 0.06666667
        %v570 = vmul.f32 %v562, 0.06666667
        %v571 = vmul.f32 %v563, 0.06666667
        %v572 = vmul.f32 %v564, 0.06666667
        %v573 = vmul.f32 %v565, 0.06666667
        %v574 = vrsqrt.pop %v566
        %v575 = vmul.f32 %v566, %v574
        %vm576 = vcmp.eq.f32.partialorder %v566, inf
        %v577 = vsel %vm576, %v566, %v575
        %vm578 = vcmp.eq.f32.partialorder %v566, 0.0
        %v579 = vand.u32 %v566, 2147483648
        %v580 = vsel %vm578, %v579, %v577
        %v581 = vrsqrt.pop %v567
        %v582 = vmul.f32 %v567, %v581
        %vm583 = vcmp.eq.f32.partialorder %v567, inf
        %v584 = vsel %vm583, %v567, %v582
        %vm585 = vcmp.eq.f32.partialorder %v567, 0.0
        %v586 = vand.u32 %v567, 2147483648
        %v587 = vsel %vm585, %v586, %v584
        %v588 = vrsqrt.pop %v568
        %v589 = vmul.f32 %v568, %v588
        %vm590 = vcmp.eq.f32.partialorder %v568, inf
        %v591 = vsel %vm590, %v568, %v589
        %vm592 = vcmp.eq.f32.partialorder %v568, 0.0
        %v593 = vand.u32 %v568, 2147483648
        %v594 = vsel %vm592, %v593, %v591
        %v595 = vrsqrt.pop %v569
        %v596 = vmul.f32 %v569, %v595
        %vm597 = vcmp.eq.f32.partialorder %v569, inf
        %v598 = vsel %vm597, %v569, %v596
        %vm599 = vcmp.eq.f32.partialorder %v569, 0.0
        %v600 = vand.u32 %v569, 2147483648
        %v601 = vsel %vm599, %v600, %v598
        %v602 = vrsqrt.pop %v570
        %v603 = vmul.f32 %v570, %v602
        %vm604 = vcmp.eq.f32.partialorder %v570, inf
        %v605 = vsel %vm604, %v570, %v603
        %vm606 = vcmp.eq.f32.partialorder %v570, 0.0
        %v607 = vand.u32 %v570, 2147483648
        %v608 = vsel %vm606, %v607, %v605
        %v609 = vrsqrt.pop %v571
        %v610 = vmul.f32 %v571, %v609
        %vm611 = vcmp.eq.f32.partialorder %v571, inf
        %v612 = vsel %vm611, %v571, %v610
        %vm613 = vcmp.eq.f32.partialorder %v571, 0.0
        %v614 = vand.u32 %v571, 2147483648
        %v615 = vsel %vm613, %v614, %v612
        %v616 = vrsqrt.pop %v572
        %v617 = vmul.f32 %v572, %v616
        %vm618 = vcmp.eq.f32.partialorder %v572, inf
        %v619 = vsel %vm618, %v572, %v617
        %vm620 = vcmp.eq.f32.partialorder %v572, 0.0
        %v621 = vand.u32 %v572, 2147483648
        %v622 = vsel %vm620, %v621, %v619
        %v623 = vrsqrt.pop %v573
        %v624 = vmul.f32 %v573, %v623
        %vm625 = vcmp.eq.f32.partialorder %v573, inf
        %v626 = vsel %vm625, %v573, %v624
        %vm627 = vcmp.eq.f32.partialorder %v573, 0.0
        %v628 = vand.u32 %v573, 2147483648
        %v629 = vsel %vm627, %v628, %v626
        %v630 = vld [vmem:[%s218] sm:$0xff]
        %632 = vset.pattern.permute.xlu0 0
        %633 = vperm.xlu0 %632, %v630
        %v634 = vpop.permute.xlu0 %633
        %v635 = vrot.slane %v634, 1
        %v636 = vrot.slane %v634, 2
        %v637 = vrot.slane %v634, 3
        %v638 = vrot.slane %v634, 4
        %v639 = vrot.slane %v634, 5
        %v640 = vrot.slane %v634, 6
        %v641 = vrot.slane %v634, 7
        %v650 = vmul.f32 %v580, %v634
        %v651 = vmul.f32 %v587, %v635
        %v652 = vmul.f32 %v594, %v636
        %v653 = vmul.f32 %v601, %v637
        %v654 = vmul.f32 %v608, %v638
        %v655 = vmul.f32 %v615, %v639
        %v656 = vmul.f32 %v622, %v640
        %v657 = vmul.f32 %v629, %v641
        %v666 = vrot.slane %v651, 7
        %vm667 = vcmask 1041409
        %v668 = vsel %vm667, %v666, %v650
        %v669 = vrot.slane %v652, 6
        %vm670 = vcmask 1042434
        %v671 = vsel %vm670, %v669, %v668
        %v672 = vrot.slane %v653, 5
        %vm673 = vcmask 1043459
        %v674 = vsel %vm673, %v672, %v671
        %v675 = vrot.slane %v654, 4
        %vm676 = vcmask 1044484
        %v677 = vsel %vm676, %v675, %v674
        %v678 = vrot.slane %v655, 3
        %vm679 = vcmask 1045509
        %v680 = vsel %vm679, %v678, %v677
        %v681 = vrot.slane %v656, 2
        %vm682 = vcmask 1046534
        %v683 = vsel %vm682, %v681, %v680
        %v684 = vrot.slane %v657, 1
        %vm685 = vcmask 1047559
        %v686 = vsel %vm685, %v684, %v683
        %688 = vst [vmem:[%s204] sm:$0xff] %v686
        %s689 = sand.u32 %s117, 1
        %s690 = scalar_lea.sflag [#allocation3], %s689
        %s691 = sand.u32 %s117, 1
        %s692 = smul.addr %s691, 8
        %s693 = scalar_lea.vmem [#allocation2], %s692
        // Predicated region
        $region33: #{tpu_custom_call.1} parent=31 // pred_check
          %p694 = pneg %p127
        $region34: #{tpu_custom_call.1} parent=31 // pred_check_branch
          %696 = sbr.rel (%p694) target = $region36
        $region35: #{tpu_custom_call.1} parent=31 // pred_region
          %s698 = ssub.s32 128, 128
          %699 = vsyncadd %s690, %s698
          %s700 = sadd.s32 %s22, %s21
          %s701 = smul.addr %s700, 128
          %s702 = scalar_lea.hbm %s3, %s701
          %s704 = sshll.u32 %s693, 4
          %s705 = int_to_ptr.vmem [resolvable:$true] %s704
          %707 = dma.vmem_to_hbm [thread:$0]  %s705, 128, %s702, %s690
        $region36: #{tpu_custom_call.1} parent=31 // pred_fallthru
          _
      $region32: #{tpu_custom_call.1} parent=5 // pred_fallthru
        _
      %p708 = scmp.le.s32.totalorder 2, %s12
      // Predicated region
      $region37: #{tpu_custom_call.1} parent=5 // pred_check
        %p709 = pneg %p708
      $region38: #{tpu_custom_call.1} parent=5 // pred_check_branch
        %711 = sbr.rel (%p709) target = $region40
      $region39: #{tpu_custom_call.1} parent=5 // pred_region
        %s712 = ssub.s32 %s12, 2
        // Predicated region
        $region41: #{tpu_custom_call.1} parent=39 // pred_check
          %p713 = pneg %p133
        $region42: #{tpu_custom_call.1} parent=39 // pred_check_branch
          %715 = sbr.rel (%p713) target = $region44
        $region43: #{tpu_custom_call.1} parent=39 // pred_region
          %s716 = sand.u32 %s118, 1
          %s717 = scalar_lea.sflag [#allocation3], %s716
          %s718 = sand.u32 %s118, 1
          %s719 = smul.addr %s718, 8
          %s720 = scalar_lea.vmem [#allocation2], %s719
          %721 = dma.done %s717, 128
        $region44: #{tpu_custom_call.1} parent=39 // pred_fallthru
          _
      $region40: #{tpu_custom_call.1} parent=5 // pred_fallthru
        _
    $region6: #{tpu_custom_call.1} parent=1 // loop_footer
      %s16 = sadd.s32 1, %s12
    $region7: #{tpu_custom_call.1} parent=1 // loop_footer_branch
      %11 = sbr.rel target = $region3
    $region8: #{tpu_custom_call.1} parent=1 // loop_exit
      _
    %722 = vsyncpa [#allocation3], 1
    %s723 = scalar_lea.sflag [#allocation3], 1
    %724 = vsyncpa %s723, 1

</llo_original>
